<compile_context>
chip_gen: v5e
topology: v5e:2x2
jax: 0.10.0
libtpu: 0.0.40
codegen_flags: <defaults>
</compile_context>

<pallas_src>
import functools

import jax
import jax.numpy as jnp
from jax.experimental import pallas as pl
from jax.experimental.pallas import tpu as pltpu


def _round_up(n, m):
    return ((n + m - 1) // m) * m


def iknet_kernel(x_ref, w1_ref, b1_ref, w2_ref, b2_ref,
                 w3_ref, b3_ref, w4_ref, b4_ref, o_ref):
    # Entire 4-layer MLP fused; all weights resident in VMEM. Dots take bf16
    # operands (MXU fast path) and accumulate in f32; bias add + ReLU run in
    # f32, then cast to bf16 for the next dot.
    x = x_ref[...].astype(jnp.bfloat16)           # cast in-kernel, not in HBM
    h = jnp.dot(x, w1_ref[...],
                preferred_element_type=jnp.float32) + b1_ref[...]
    h = jnp.maximum(h, 0.0).astype(jnp.bfloat16)
    h = jnp.dot(h, w2_ref[...],
                preferred_element_type=jnp.float32) + b2_ref[...]
    h = jnp.maximum(h, 0.0).astype(jnp.bfloat16)
    h = jnp.dot(h, w3_ref[...],
                preferred_element_type=jnp.float32) + b3_ref[...]
    h = jnp.maximum(h, 0.0).astype(jnp.bfloat16)
    out = jnp.dot(h, w4_ref[...],
                  preferred_element_type=jnp.float32) + b4_ref[...]
    o_ref[...] = out.astype(o_ref.dtype)


def _vmem_budget_bytes(tile, input_dim, output_dim):
    # Weights (bf16) + biases (f32); pipeline double-buffers them even though
    # they are revisit-resident, so count x2.
    w_elems = input_dim * 128 + 128 * 256 + 256 * 128 + 128 * output_dim
    b_elems = 128 + 256 + 128 + output_dim
    weights = 2 * (2 * w_elems) + 2 * (4 * b_elems)
    # x tile (f32) and out tile (f32), double-buffered.
    io = 2 * (4 * tile * input_dim) + 2 * (4 * tile * output_dim)
    # Fused intermediates: f32 accumulators + bf16 copies of the hidden acts.
    inter = tile * (128 + 256 + 128) * (4 + 2)
    total = weights + io + inter
    # 2x headroom; floor at 16 MiB, cap below v7x's 64 MiB physical VMEM.
    return int(min(max(2 * total, 16 * 1024 * 1024), 48 * 1024 * 1024))


@functools.partial(jax.jit, static_argnames=("batch_tile",))
def iknet_forward(x, params, *, batch_tile=512):
    """x: (B, input_dim) f32. params: (in,out) weights, (1,out) biases (f32)."""
    B, input_dim = x.shape
    output_dim = params["w4"].shape[1]

    # Batch tile: multiple of 16 (bf16 sublane packing), never larger than the
    # (rounded) batch. Cap so grid >= 2 whenever there are >= 32 rows, so the
    # "parallel" batch axis shards across both v7x TensorCores.
    b16 = _round_up(B, 16)
    tile = _round_up(min(batch_tile, b16), 16)
    if b16 >= 32:
        half = max(16, (b16 // 2 // 16) * 16)
        tile = min(tile, half)
    b_pad = _round_up(B, tile)
    grid = b_pad // tile

    # Pad only the batch dim (no-op at B=16); features stay at their native
    # width (12 in / 6 out). Under jit this fuses with the surrounding ops.
    x_p = x if b_pad == B else jnp.pad(x, ((0, b_pad - B), (0, 0)))

    # Weights in bf16 (MXU operands), biases in f32 (added to f32 accumulator).
    w1 = params["w1"].astype(jnp.bfloat16)
    w2 = params["w2"].astype(jnp.bfloat16)
    w3 = params["w3"].astype(jnp.bfloat16)
    w4 = params["w4"].astype(jnp.bfloat16)
    b1 = params["b1"].astype(jnp.float32)
    b2 = params["b2"].astype(jnp.float32)
    b3 = params["b3"].astype(jnp.float32)
    b4 = params["b4"].astype(jnp.float32)
    weight_args = (w1, b1, w2, b2, w3, b3, w4, b4)

    def full_spec(a):
        # Constant index_map: the whole array is one block that stays resident
        # across grid steps (no per-step re-DMA of the ~0.2 MB of weights).
        return pl.BlockSpec(a.shape, lambda i: (0, 0))

    out_padded = pl.pallas_call(
        iknet_kernel,
        out_shape=jax.ShapeDtypeStruct((b_pad, output_dim), jnp.float32),
        grid_spec=pltpu.PrefetchScalarGridSpec(
            num_scalar_prefetch=0,
            grid=(grid,),
            in_specs=[pl.BlockSpec((tile, input_dim), lambda i: (i, 0))]
                     + [full_spec(a) for a in weight_args],
            out_specs=pl.BlockSpec((tile, output_dim), lambda i: (i, 0)),
        ),
        compiler_params=pltpu.CompilerParams(
            dimension_semantics=("parallel",),
            vmem_limit_bytes=_vmem_budget_bytes(tile, input_dim, output_dim),
        ),
    )(x_p, *weight_args)

    return out_padded[:B]


def init_params(key, input_dim, output_dim):
    """Deterministic init matching nn.Linear shapes, stored as (in, out)."""
    dims = [(input_dim, 128), (128, 256), (256, 128), (128, output_dim)]
    params = {}
    for idx, (fan_in, fan_out) in enumerate(dims, start=1):
        key, kw, kb = jax.random.split(key, 3)
        bound = 1.0 / jnp.sqrt(fan_in)
        params[f"w{idx}"] = jax.random.uniform(
            kw, (fan_in, fan_out), jnp.float32, -bound, bound)
        params[f"b{idx}"] = jax.random.uniform(
            kb, (1, fan_out), jnp.float32, -bound, bound)
    return params


def iknet_reference(x, params):
    h = jnp.maximum(x @ params["w1"] + params["b1"], 0.0)
    h = jnp.maximum(h @ params["w2"] + params["b2"], 0.0)
    h = jnp.maximum(h @ params["w3"] + params["b3"], 0.0)
    return h @ params["w4"] + params["b4"]


if __name__ == "__main__":
    input_dim, output_dim = 12, 6
    B = 16

    key = jax.random.PRNGKey(0)
    key, kx = jax.random.split(key)
    x = jax.random.normal(kx, (B, input_dim), jnp.float32)
    params = init_params(key, input_dim, output_dim)

    out = iknet_forward(x, params)
    out = jax.block_until_ready(out)

    ref = iknet_reference(x, params)
    assert out.shape == (B, output_dim)
    # Kernel uses bf16 matmul operands with f32 accumulation -> compare to the
    # f32 reference with a bf16-appropriate tolerance.
    assert jnp.allclose(out, ref, atol=5e-2, rtol=5e-2), \
        float(jnp.max(jnp.abs(out - ref)))

    print("KERNEL_OK")
</pallas_src>

<mosaic_0001>
module attributes {stable_mosaic.version = 11 : i64} {
  func.func @iknet_kernel(%arg0: i32, %arg1: memref<16x12xf32, #tpu.memory_space<vmem>>, %arg2: memref<12x128xbf16, #tpu.memory_space<vmem>>, %arg3: memref<1x128xf32, #tpu.memory_space<vmem>>, %arg4: memref<128x256xbf16, #tpu.memory_space<vmem>>, %arg5: memref<1x256xf32, #tpu.memory_space<vmem>>, %arg6: memref<256x128xbf16, #tpu.memory_space<vmem>>, %arg7: memref<1x128xf32, #tpu.memory_space<vmem>>, %arg8: memref<128x6xbf16, #tpu.memory_space<vmem>>, %arg9: memref<1x6xf32, #tpu.memory_space<vmem>>, %arg10: memref<16x6xf32, #tpu.memory_space<vmem>>) attributes {dimension_semantics = [#tpu.dimension_semantics<parallel>], iteration_bounds = array<i64: 1>, scalar_prefetch = 0 : i64, scratch_operands = 0 : i64, tpu.core_type = #tpu.core_type<tc>, window_params = [{transform_indices = @transform_0, window_bounds = array<i64: 16, 12>}, {pipeline_mode = #tpu.pipeline_mode<synchronous>, transform_indices = @transform_1, window_bounds = array<i64: 12, 128>}, {pipeline_mode = #tpu.pipeline_mode<synchronous>, transform_indices = @transform_2, window_bounds = array<i64: 1, 128>}, {pipeline_mode = #tpu.pipeline_mode<synchronous>, transform_indices = @transform_3, window_bounds = array<i64: 128, 256>}, {pipeline_mode = #tpu.pipeline_mode<synchronous>, transform_indices = @transform_4, window_bounds = array<i64: 1, 256>}, {pipeline_mode = #tpu.pipeline_mode<synchronous>, transform_indices = @transform_5, window_bounds = array<i64: 256, 128>}, {pipeline_mode = #tpu.pipeline_mode<synchronous>, transform_indices = @transform_6, window_bounds = array<i64: 1, 128>}, {pipeline_mode = #tpu.pipeline_mode<synchronous>, transform_indices = @transform_7, window_bounds = array<i64: 128, 6>}, {pipeline_mode = #tpu.pipeline_mode<synchronous>, transform_indices = @transform_8, window_bounds = array<i64: 1, 6>}, {transform_indices = @transform_9, window_bounds = array<i64: 16, 6>}]} {
    %c0 = arith.constant 0 : index
    %c0_0 = arith.constant 0 : index
    %0 = vector.load %arg1[%c0, %c0_0] : memref<16x12xf32, #tpu.memory_space<vmem>>, vector<16x12xf32>
    %1 = arith.truncf %0 : vector<16x12xf32> to vector<16x12xbf16>
    %c0_1 = arith.constant 0 : index
    %c0_2 = arith.constant 0 : index
    %2 = vector.load %arg2[%c0_1, %c0_2] : memref<12x128xbf16, #tpu.memory_space<vmem>>, vector<12x128xbf16>
    %cst = arith.constant dense<0.000000e+00> : vector<16x128xf32>
    %3 = tpu.matmul %1, %2, %cst {dimension_numbers = #tpu.dot_dimension_numbers<[1], [0], [0], [1], [0, 0, 1, 1], [], []>} : vector<16x12xbf16>, vector<12x128xbf16>, vector<16x128xf32> -> vector<16x128xf32>
    %c0_3 = arith.constant 0 : index
    %c0_4 = arith.constant 0 : index
    %4 = vector.load %arg3[%c0_3, %c0_4] : memref<1x128xf32, #tpu.memory_space<vmem>>, vector<1x128xf32>
    %5 = vector.broadcast %4 : vector<1x128xf32> to vector<16x128xf32>
    %6 = arith.addf %3, %5 : vector<16x128xf32>
    %cst_5 = arith.constant 0.000000e+00 : f32
    %7 = vector.broadcast %cst_5 : f32 to vector<16x128xf32>
    %8 = arith.maximumf %6, %7 : vector<16x128xf32>
    %9 = arith.truncf %8 : vector<16x128xf32> to vector<16x128xbf16>
    %c0_6 = arith.constant 0 : index
    %c0_7 = arith.constant 0 : index
    %10 = vector.load %arg4[%c0_6, %c0_7] : memref<128x256xbf16, #tpu.memory_space<vmem>>, vector<128x256xbf16>
    %cst_8 = arith.constant dense<0.000000e+00> : vector<16x256xf32>
    %11 = tpu.matmul %9, %10, %cst_8 {dimension_numbers = #tpu.dot_dimension_numbers<[1], [0], [0], [1], [0, 0, 1, 1], [], []>} : vector<16x128xbf16>, vector<128x256xbf16>, vector<16x256xf32> -> vector<16x256xf32>
    %c0_9 = arith.constant 0 : index
    %c0_10 = arith.constant 0 : index
    %12 = vector.load %arg5[%c0_9, %c0_10] : memref<1x256xf32, #tpu.memory_space<vmem>>, vector<1x256xf32>
    %13 = vector.broadcast %12 : vector<1x256xf32> to vector<16x256xf32>
    %14 = arith.addf %11, %13 : vector<16x256xf32>
    %cst_11 = arith.constant 0.000000e+00 : f32
    %15 = vector.broadcast %cst_11 : f32 to vector<16x256xf32>
    %16 = arith.maximumf %14, %15 : vector<16x256xf32>
    %17 = arith.truncf %16 : vector<16x256xf32> to vector<16x256xbf16>
    %c0_12 = arith.constant 0 : index
    %c0_13 = arith.constant 0 : index
    %18 = vector.load %arg6[%c0_12, %c0_13] : memref<256x128xbf16, #tpu.memory_space<vmem>>, vector<256x128xbf16>
    %cst_14 = arith.constant dense<0.000000e+00> : vector<16x128xf32>
    %19 = tpu.matmul %17, %18, %cst_14 {dimension_numbers = #tpu.dot_dimension_numbers<[1], [0], [0], [1], [0, 0, 1, 1], [], []>} : vector<16x256xbf16>, vector<256x128xbf16>, vector<16x128xf32> -> vector<16x128xf32>
    %c0_15 = arith.constant 0 : index
    %c0_16 = arith.constant 0 : index
    %20 = vector.load %arg7[%c0_15, %c0_16] : memref<1x128xf32, #tpu.memory_space<vmem>>, vector<1x128xf32>
    %21 = vector.broadcast %20 : vector<1x128xf32> to vector<16x128xf32>
    %22 = arith.addf %19, %21 : vector<16x128xf32>
    %cst_17 = arith.constant 0.000000e+00 : f32
    %23 = vector.broadcast %cst_17 : f32 to vector<16x128xf32>
    %24 = arith.maximumf %22, %23 : vector<16x128xf32>
    %25 = arith.truncf %24 : vector<16x128xf32> to vector<16x128xbf16>
    %c0_18 = arith.constant 0 : index
    %c0_19 = arith.constant 0 : index
    %26 = vector.load %arg8[%c0_18, %c0_19] : memref<128x6xbf16, #tpu.memory_space<vmem>>, vector<128x6xbf16>
    %cst_20 = arith.constant dense<0.000000e+00> : vector<16x6xf32>
    %27 = tpu.matmul %25, %26, %cst_20 {dimension_numbers = #tpu.dot_dimension_numbers<[1], [0], [0], [1], [0, 0, 1, 1], [], []>} : vector<16x128xbf16>, vector<128x6xbf16>, vector<16x6xf32> -> vector<16x6xf32>
    %c0_21 = arith.constant 0 : index
    %c0_22 = arith.constant 0 : index
    %28 = vector.load %arg9[%c0_21, %c0_22] : memref<1x6xf32, #tpu.memory_space<vmem>>, vector<1x6xf32>
    %29 = vector.broadcast %28 : vector<1x6xf32> to vector<16x6xf32>
    %30 = arith.addf %27, %29 : vector<16x6xf32>
    %c0_23 = arith.constant 0 : index
    %c0_24 = arith.constant 0 : index
    %31 = vector.load %arg10[%c0_23, %c0_24] : memref<16x6xf32, #tpu.memory_space<vmem>>, vector<16x6xf32>
    tpu.vector_store %arg10[%c0_23, %c0_24], %30 {strides = array<i32>} : memref<16x6xf32, #tpu.memory_space<vmem>>, vector<16x6xf32>,
    return
  }
  func.func @transform_0(%arg0: i32) -> (i32, i32) {
    %c0_i32 = arith.constant 0 : i32
    %c0_i32_0 = arith.constant 0 : i32
    return %arg0, %c0_i32 : i32, i32
  }
  func.func @transform_1(%arg0: i32) -> (i32, i32) {
    %c0_i32 = arith.constant 0 : i32
    %c0_i32_0 = arith.constant 0 : i32
    %c0_i32_1 = arith.constant 0 : i32
    return %c0_i32, %c0_i32_0 : i32, i32
  }
  func.func @transform_2(%arg0: i32) -> (i32, i32) {
    %c0_i32 = arith.constant 0 : i32
    %c0_i32_0 = arith.constant 0 : i32
    %c0_i32_1 = arith.constant 0 : i32
    return %c0_i32, %c0_i32_0 : i32, i32
  }
  func.func @transform_3(%arg0: i32) -> (i32, i32) {
    %c0_i32 = arith.constant 0 : i32
    %c0_i32_0 = arith.constant 0 : i32
    %c0_i32_1 = arith.constant 0 : i32
    return %c0_i32, %c0_i32_0 : i32, i32
  }
  func.func @transform_4(%arg0: i32) -> (i32, i32) {
    %c0_i32 = arith.constant 0 : i32
    %c0_i32_0 = arith.constant 0 : i32
    %c0_i32_1 = arith.constant 0 : i32
    return %c0_i32, %c0_i32_0 : i32, i32
  }
  func.func @transform_5(%arg0: i32) -> (i32, i32) {
    %c0_i32 = arith.constant 0 : i32
    %c0_i32_0 = arith.constant 0 : i32
    %c0_i32_1 = arith.constant 0 : i32
    return %c0_i32, %c0_i32_0 : i32, i32
  }
  func.func @transform_6(%arg0: i32) -> (i32, i32) {
    %c0_i32 = arith.constant 0 : i32
    %c0_i32_0 = arith.constant 0 : i32
    %c0_i32_1 = arith.constant 0 : i32
    return %c0_i32, %c0_i32_0 : i32, i32
  }
  func.func @transform_7(%arg0: i32) -> (i32, i32) {
    %c0_i32 = arith.constant 0 : i32
    %c0_i32_0 = arith.constant 0 : i32
    %c0_i32_1 = arith.constant 0 : i32
    return %c0_i32, %c0_i32_0 : i32, i32
  }
  func.func @transform_8(%arg0: i32) -> (i32, i32) {
    %c0_i32 = arith.constant 0 : i32
    %c0_i32_0 = arith.constant 0 : i32
    %c0_i32_1 = arith.constant 0 : i32
    return %c0_i32, %c0_i32_0 : i32, i32
  }
  func.func @transform_9(%arg0: i32) -> (i32, i32) {
    %c0_i32 = arith.constant 0 : i32
    %c0_i32_0 = arith.constant 0 : i32
    return %arg0, %c0_i32 : i32, i32
  }
}

</mosaic_0001>

<llo_original>
// kernel: iknet_forward.1
$region0: #{iknet_forward.1}
  #allocation0 [shape = 'u32[]', space=smem, size = 0x4, offset = 0x4, fixed_abs, tag = 'smem constant byte address 0x4 - core index']
  #allocation1 [shape = 'u32[72,128]{1,0:T(1,128)}', space=vmem, size = 0x9000, scoped, tag = 'internal scratch']
  %s0 = inlined_call_operand.vmem [shape: f32[16,12], index: 0, kind: input, shape index: {}]
  %s1 = inlined_call_operand.vmem [shape: bf16[12,128], index: 1, kind: input, shape index: {}]
  %s2 = inlined_call_operand.vmem [shape: f32[1,128], index: 2, kind: input, shape index: {}]
  %s3 = inlined_call_operand.vmem [shape: bf16[128,256], index: 3, kind: input, shape index: {}]
  %s4 = inlined_call_operand.vmem [shape: f32[1,256], index: 4, kind: input, shape index: {}]
  %s5 = inlined_call_operand.vmem [shape: bf16[256,128], index: 5, kind: input, shape index: {}]
  %s6 = inlined_call_operand.vmem [shape: f32[1,128], index: 6, kind: input, shape index: {}]
  %s7 = inlined_call_operand.vmem [shape: bf16[128,6], index: 7, kind: input, shape index: {}]
  %s8 = inlined_call_operand.vmem [shape: f32[1,6], index: 8, kind: input, shape index: {}]
  %s9 = inlined_call_operand.vmem [shape: f32[16,6], index: 9, kind: output, shape index: {}]
  %s10 = sld [smem:[#allocation0]]
  $region46: #{iknet_forward.1} parent=0
    _
  %s12 = ssub.s32 1, %s10
  %s13 = scalar_select 0, %s12, %s10
  // Predicated region
  $region2: #{iknet_forward.1} parent=0 // pred_check
    _
  $region3: #{iknet_forward.1} parent=0 // pred_check_branch
    %15 = sbr.rel (0) target = $region5
  $region4: #{iknet_forward.1} parent=0 // pred_region
    _
  $region5: #{iknet_forward.1} parent=0 // pred_fallthru
    _
  // Predicated region
  $region6: #{iknet_forward.1} parent=0 // pred_check
    _
  $region7: #{iknet_forward.1} parent=0 // pred_check_branch
    %17 = sbr.rel (0) target = $region9
  $region8: #{iknet_forward.1} parent=0 // pred_region
    _
  $region9: #{iknet_forward.1} parent=0 // pred_fallthru
    _
  // Predicated region
  $region10: #{iknet_forward.1} parent=0 // pred_check
    _
  $region11: #{iknet_forward.1} parent=0 // pred_check_branch
    %19 = sbr.rel (0) target = $region13
  $region12: #{iknet_forward.1} parent=0 // pred_region
    _
  $region13: #{iknet_forward.1} parent=0 // pred_fallthru
    _
  // Predicated region
  $region14: #{iknet_forward.1} parent=0 // pred_check
    _
  $region15: #{iknet_forward.1} parent=0 // pred_check_branch
    %21 = sbr.rel (0) target = $region17
  $region16: #{iknet_forward.1} parent=0 // pred_region
    _
  $region17: #{iknet_forward.1} parent=0 // pred_fallthru
    _
  // Predicated region
  $region18: #{iknet_forward.1} parent=0 // pred_check
    _
  $region19: #{iknet_forward.1} parent=0 // pred_check_branch
    %23 = sbr.rel (0) target = $region21
  $region20: #{iknet_forward.1} parent=0 // pred_region
    _
  $region21: #{iknet_forward.1} parent=0 // pred_fallthru
    _
  // Predicated region
  $region22: #{iknet_forward.1} parent=0 // pred_check
    _
  $region23: #{iknet_forward.1} parent=0 // pred_check_branch
    %25 = sbr.rel (0) target = $region25
  $region24: #{iknet_forward.1} parent=0 // pred_region
    _
  $region25: #{iknet_forward.1} parent=0 // pred_fallthru
    _
  // Predicated region
  $region26: #{iknet_forward.1} parent=0 // pred_check
    _
  $region27: #{iknet_forward.1} parent=0 // pred_check_branch
    %27 = sbr.rel (0) target = $region29
  $region28: #{iknet_forward.1} parent=0 // pred_region
    _
  $region29: #{iknet_forward.1} parent=0 // pred_fallthru
    _
  // Predicated region
  $region30: #{iknet_forward.1} parent=0 // pred_check
    _
  $region31: #{iknet_forward.1} parent=0 // pred_check_branch
    %29 = sbr.rel (0) target = $region33
  $region32: #{iknet_forward.1} parent=0 // pred_region
    _
  $region33: #{iknet_forward.1} parent=0 // pred_fallthru
    _
  // Predicated region
  $region34: #{iknet_forward.1} parent=0 // pred_check
    _
  $region35: #{iknet_forward.1} parent=0 // pred_check_branch
    %31 = sbr.rel (0) target = $region37
  $region36: #{iknet_forward.1} parent=0 // pred_region
    _
  $region37: #{iknet_forward.1} parent=0 // pred_fallthru
    _
  %v33 = vld [vmem:[%s0] sm:$0xff]
  %v34 = vld [vmem:[%s0 + $0x8] sm:$0xff]
  %v35 = vpack.c.bf16 %v34, %v33
  %v36 = vld [vmem:[%s1] sm:$0xf]
  %v37 = vld [vmem:[%s1 + $0x4] sm:$0x3]
  %v38 = vld [vmem:[%s2] sm:$0x1]
  %v40 = vperm.slane %v38, 0
  %v44 = vunpack.c.l.b16 %v36
  %v45 = vunpack.c.l.b16 %v37
  %v46 = vpack.c.b16 %v45, %v44
  %vm47 = vcmask 97280
  %v49 = vsel %vm47, %v35, 0
  %vm51 = vcmask 1045504
  %v53 = vsel %vm51, %v46, 0
  %55 = vmatpush.bf16.msra.mxu0 0
  %56 = vmatpush.bf16.msra.mxu0 0
  %57 = vmatpush.bf16.msra.mxu0 0
  %58 = vmatpush.bf16.msra.mxu0 0
  %59 = vmatpush.bf16.msra.mxu0 0
  %60 = vmatpush.bf16.msra.mxu0 0
  %61 = vmatpush.bf16.msra.mxu0 0
  %62 = vmatpush.bf16.msra.mxu0 %v53
  %63 = vmatmul.bf16.gmra.mxu0 %v49
  %v64 = vpop.f32.mrf.mxu0
  %v65 = vadd.f32 %v40, %v64
  %v66 = vpop.f32.mrf.mxu0
  %v67 = vadd.f32 %v40, %v66
  %68 = vdwg.mxu0
  %v69 = vmax.f32 %v65, 0.0
  %v70 = vmax.f32 %v67, 0.0
  %v71 = vpack.c.bf16 %v70, %v69
  %v72 = vld [vmem:[%s3] sm:$0xff]
  %v73 = vld [vmem:[%s3 + $0x8] sm:$0xff]
  %v74 = vld [vmem:[%s3 + $0x10] sm:$0xff]
  %v75 = vld [vmem:[%s3 + $0x18] sm:$0xff]
  %v76 = vld [vmem:[%s3 + $0x20] sm:$0xff]
  %v77 = vld [vmem:[%s3 + $0x28] sm:$0xff]
  %v78 = vld [vmem:[%s3 + $0x30] sm:$0xff]
  %v79 = vld [vmem:[%s3 + $0x38] sm:$0xff]
  %v80 = vld [vmem:[%s3 + $0x40] sm:$0xff]
  %v81 = vld [vmem:[%s3 + $0x48] sm:$0xff]
  %v82 = vld [vmem:[%s3 + $0x50] sm:$0xff]
  %v83 = vld [vmem:[%s3 + $0x58] sm:$0xff]
  %v84 = vld [vmem:[%s3 + $0x60] sm:$0xff]
  %v85 = vld [vmem:[%s3 + $0x68] sm:$0xff]
  %v86 = vld [vmem:[%s3 + $0x70] sm:$0xff]
  %v87 = vld [vmem:[%s3 + $0x78] sm:$0xff]
  %v88 = vld [vmem:[%s4] sm:$0x3]
  %v90 = vperm.slane %v88, 0
  %v91 = vperm.slane %v88, 1
  %v110 = vunpack.c.l.b16 %v72
  %v111 = vunpack.c.h.b16 %v72
  %v112 = vunpack.c.l.b16 %v73
  %v113 = vunpack.c.h.b16 %v73
  %v114 = vunpack.c.l.b16 %v74
  %v115 = vunpack.c.h.b16 %v74
  %v116 = vunpack.c.l.b16 %v75
  %v117 = vunpack.c.h.b16 %v75
  %v118 = vunpack.c.l.b16 %v76
  %v119 = vunpack.c.h.b16 %v76
  %v120 = vunpack.c.l.b16 %v77
  %v121 = vunpack.c.h.b16 %v77
  %v122 = vunpack.c.l.b16 %v78
  %v123 = vunpack.c.h.b16 %v78
  %v124 = vunpack.c.l.b16 %v79
  %v125 = vunpack.c.h.b16 %v79
  %v126 = vunpack.c.l.b16 %v80
  %v127 = vunpack.c.h.b16 %v80
  %v128 = vunpack.c.l.b16 %v81
  %v129 = vunpack.c.h.b16 %v81
  %v130 = vunpack.c.l.b16 %v82
  %v131 = vunpack.c.h.b16 %v82
  %v132 = vunpack.c.l.b16 %v83
  %v133 = vunpack.c.h.b16 %v83
  %v134 = vunpack.c.l.b16 %v84
  %v135 = vunpack.c.h.b16 %v84
  %v136 = vunpack.c.l.b16 %v85
  %v137 = vunpack.c.h.b16 %v85
  %v138 = vunpack.c.l.b16 %v86
  %v139 = vunpack.c.h.b16 %v86
  %v140 = vunpack.c.l.b16 %v87
  %v141 = vunpack.c.h.b16 %v87
  %v142 = vpack.c.b16 %v112, %v110
  %v143 = vpack.c.b16 %v113, %v111
  %v144 = vpack.c.b16 %v116, %v114
  %v145 = vpack.c.b16 %v117, %v115
  %v146 = vpack.c.b16 %v120, %v118
  %v147 = vpack.c.b16 %v121, %v119
  %v148 = vpack.c.b16 %v124, %v122
  %v149 = vpack.c.b16 %v125, %v123
  %v150 = vpack.c.b16 %v128, %v126
  %v151 = vpack.c.b16 %v129, %v127
  %v152 = vpack.c.b16 %v132, %v130
  %v153 = vpack.c.b16 %v133, %v131
  %v154 = vpack.c.b16 %v136, %v134
  %v155 = vpack.c.b16 %v137, %v135
  %v156 = vpack.c.b16 %v140, %v138
  %v157 = vpack.c.b16 %v141, %v139
  %174 = vmatpush.bf16.msra.mxu0 %v156
  %175 = vmatpush.bf16.msra.mxu0 %v154
  %176 = vmatpush.bf16.msra.mxu0 %v152
  %177 = vmatpush.bf16.msra.mxu0 %v150
  %178 = vmatpush.bf16.msra.mxu0 %v148
  %179 = vmatpush.bf16.msra.mxu0 %v146
  %180 = vmatpush.bf16.msra.mxu0 %v144
  %181 = vmatpush.bf16.msra.mxu0 %v142
  %182 = vmatmul.bf16.gmra.mxu0 %v71
  %v183 = vpop.f32.mrf.mxu0
  %v184 = vadd.f32 %v90, %v183
  %v185 = vpop.f32.mrf.mxu0
  %v186 = vadd.f32 %v90, %v185
  %187 = vdwg.mxu0
  %188 = vmatpush.bf16.msra.mxu0 %v157
  %189 = vmatpush.bf16.msra.mxu0 %v155
  %190 = vmatpush.bf16.msra.mxu0 %v153
  %191 = vmatpush.bf16.msra.mxu0 %v151
  %192 = vmatpush.bf16.msra.mxu0 %v149
  %193 = vmatpush.bf16.msra.mxu0 %v147
  %194 = vmatpush.bf16.msra.mxu0 %v145
  %195 = vmatpush.bf16.msra.mxu0 %v143
  %196 = vmatmul.bf16.gmra.mxu0 %v71
  %v197 = vpop.f32.mrf.mxu0
  %v198 = vadd.f32 %v91, %v197
  %v199 = vpop.f32.mrf.mxu0
  %v200 = vadd.f32 %v91, %v199
  %201 = vdwg.mxu0
  %v202 = vmax.f32 %v184, 0.0
  %v203 = vmax.f32 %v198, 0.0
  %v204 = vmax.f32 %v186, 0.0
  %v205 = vmax.f32 %v200, 0.0
  %v206 = vpack.c.bf16 %v204, %v202
  %v207 = vpack.c.bf16 %v205, %v203
  %v208 = vld [vmem:[%s5] sm:$0xf]
  %v209 = vld [vmem:[%s5 + $0x4] sm:$0xf]
  %v210 = vld [vmem:[%s5 + $0x8] sm:$0xf]
  %v211 = vld [vmem:[%s5 + $0xc] sm:$0xf]
  %v212 = vld [vmem:[%s5 + $0x10] sm:$0xf]
  %v213 = vld [vmem:[%s5 + $0x14] sm:$0xf]
  %v214 = vld [vmem:[%s5 + $0x18] sm:$0xf]
  %v215 = vld [vmem:[%s5 + $0x1c] sm:$0xf]
  %v216 = vld [vmem:[%s5 + $0x20] sm:$0xf]
  %v217 = vld [vmem:[%s5 + $0x24] sm:$0xf]
  %v218 = vld [vmem:[%s5 + $0x28] sm:$0xf]
  %v219 = vld [vmem:[%s5 + $0x2c] sm:$0xf]
  %v220 = vld [vmem:[%s5 + $0x30] sm:$0xf]
  %v221 = vld [vmem:[%s5 + $0x34] sm:$0xf]
  %v222 = vld [vmem:[%s5 + $0x38] sm:$0xf]
  %v223 = vld [vmem:[%s5 + $0x3c] sm:$0xf]
  %v224 = vld [vmem:[%s5 + $0x40] sm:$0xf]
  %v225 = vld [vmem:[%s5 + $0x44] sm:$0xf]
  %v226 = vld [vmem:[%s5 + $0x48] sm:$0xf]
  %v227 = vld [vmem:[%s5 + $0x4c] sm:$0xf]
  %v228 = vld [vmem:[%s5 + $0x50] sm:$0xf]
  %v229 = vld [vmem:[%s5 + $0x54] sm:$0xf]
  %v230 = vld [vmem:[%s5 + $0x58] sm:$0xf]
  %v231 = vld [vmem:[%s5 + $0x5c] sm:$0xf]
  %v232 = vld [vmem:[%s5 + $0x60] sm:$0xf]
  %v233 = vld [vmem:[%s5 + $0x64] sm:$0xf]
  %v234 = vld [vmem:[%s5 + $0x68] sm:$0xf]
  %v235 = vld [vmem:[%s5 + $0x6c] sm:$0xf]
  %v236 = vld [vmem:[%s5 + $0x70] sm:$0xf]
  %v237 = vld [vmem:[%s5 + $0x74] sm:$0xf]
  %v238 = vld [vmem:[%s5 + $0x78] sm:$0xf]
  %v239 = vld [vmem:[%s5 + $0x7c] sm:$0xf]
  %v240 = vld [vmem:[%s6] sm:$0x1]
  %v242 = vperm.slane %v240, 0
  %v276 = vunpack.c.l.b16 %v208
  %v277 = vunpack.c.l.b16 %v209
  %v278 = vunpack.c.l.b16 %v210
  %v279 = vunpack.c.l.b16 %v211
  %v280 = vunpack.c.l.b16 %v212
  %v281 = vunpack.c.l.b16 %v213
  %v282 = vunpack.c.l.b16 %v214
  %v283 = vunpack.c.l.b16 %v215
  %v284 = vunpack.c.l.b16 %v216
  %v285 = vunpack.c.l.b16 %v217
  %v286 = vunpack.c.l.b16 %v218
  %v287 = vunpack.c.l.b16 %v219
  %v288 = vunpack.c.l.b16 %v220
  %v289 = vunpack.c.l.b16 %v221
  %v290 = vunpack.c.l.b16 %v222
  %v291 = vunpack.c.l.b16 %v223
  %v292 = vunpack.c.l.b16 %v224
  %v293 = vunpack.c.l.b16 %v225
  %v294 = vunpack.c.l.b16 %v226
  %v295 = vunpack.c.l.b16 %v227
  %v296 = vunpack.c.l.b16 %v228
  %v297 = vunpack.c.l.b16 %v229
  %v298 = vunpack.c.l.b16 %v230
  %v299 = vunpack.c.l.b16 %v231
  %v300 = vunpack.c.l.b16 %v232
  %v301 = vunpack.c.l.b16 %v233
  %v302 = vunpack.c.l.b16 %v234
  %v303 = vunpack.c.l.b16 %v235
  %v304 = vunpack.c.l.b16 %v236
  %v305 = vunpack.c.l.b16 %v237
  %v306 = vunpack.c.l.b16 %v238
  %v307 = vunpack.c.l.b16 %v239
  %v308 = vpack.c.b16 %v277, %v276
  %v309 = vpack.c.b16 %v279, %v278
  %v310 = vpack.c.b16 %v281, %v280
  %v311 = vpack.c.b16 %v283, %v282
  %v312 = vpack.c.b16 %v285, %v284
  %v313 = vpack.c.b16 %v287, %v286
  %v314 = vpack.c.b16 %v289, %v288
  %v315 = vpack.c.b16 %v291, %v290
  %v316 = vpack.c.b16 %v293, %v292
  %v317 = vpack.c.b16 %v295, %v294
  %v318 = vpack.c.b16 %v297, %v296
  %v319 = vpack.c.b16 %v299, %v298
  %v320 = vpack.c.b16 %v301, %v300
  %v321 = vpack.c.b16 %v303, %v302
  %v322 = vpack.c.b16 %v305, %v304
  %v323 = vpack.c.b16 %v307, %v306
  %340 = vmatpush.bf16.msra.mxu0 %v315
  %341 = vmatpush.bf16.msra.mxu0 %v314
  %342 = vmatpush.bf16.msra.mxu0 %v313
  %343 = vmatpush.bf16.msra.mxu0 %v312
  %344 = vmatpush.bf16.msra.mxu0 %v311
  %345 = vmatpush.bf16.msra.mxu0 %v310
  %346 = vmatpush.bf16.msra.mxu0 %v309
  %347 = vmatpush.bf16.msra.mxu0 %v308
  %348 = vmatmul.bf16.gmra.mxu0 %v206
  %v349 = vpop.f32.mrf.mxu0
  %v350 = vadd.f32 %v242, %v349
  %v351 = vpop.f32.mrf.mxu0
  %v352 = vadd.f32 %v242, %v351
  %353 = vdwg.mxu0
  %354 = vmatpush.bf16.msra.mxu0 %v323
  %355 = vmatpush.bf16.msra.mxu0 %v322
  %356 = vmatpush.bf16.msra.mxu0 %v321
  %357 = vmatpush.bf16.msra.mxu0 %v320
  %358 = vmatpush.bf16.msra.mxu0 %v319
  %359 = vmatpush.bf16.msra.mxu0 %v318
  %360 = vmatpush.bf16.msra.mxu0 %v317
  %361 = vmatpush.bf16.msra.mxu0 %v316
  %362 = vmatmul.bf16.gmra.mxu0 %v207
  %v363 = vpop.f32.mrf.mxu0
  %v364 = vadd.f32 %v350, %v363
  %v365 = vpop.f32.mrf.mxu0
  %v366 = vadd.f32 %v352, %v365
  %367 = vdwg.mxu0
  %v368 = vmax.f32 %v364, 0.0
  %v369 = vmax.f32 %v366, 0.0
  %v370 = vpack.c.bf16 %v369, %v368
  %v371 = vld [vmem:[%s7] sm:$0xf]
  %v372 = vld [vmem:[%s7 + $0x4] sm:$0xf]
  %v373 = vld [vmem:[%s7 + $0x8] sm:$0xf]
  %v374 = vld [vmem:[%s7 + $0xc] sm:$0xf]
  %v375 = vld [vmem:[%s7 + $0x10] sm:$0xf]
  %v376 = vld [vmem:[%s7 + $0x14] sm:$0xf]
  %v377 = vld [vmem:[%s7 + $0x18] sm:$0xf]
  %v378 = vld [vmem:[%s7 + $0x1c] sm:$0xf]
  %v379 = vld [vmem:[%s7 + $0x20] sm:$0xf]
  %v380 = vld [vmem:[%s7 + $0x24] sm:$0xf]
  %v381 = vld [vmem:[%s7 + $0x28] sm:$0xf]
  %v382 = vld [vmem:[%s7 + $0x2c] sm:$0xf]
  %v383 = vld [vmem:[%s7 + $0x30] sm:$0xf]
  %v384 = vld [vmem:[%s7 + $0x34] sm:$0xf]
  %v385 = vld [vmem:[%s7 + $0x38] sm:$0xf]
  %v386 = vld [vmem:[%s7 + $0x3c] sm:$0xf]
  %v387 = vld [vmem:[%s8] sm:$0x1]
  %v389 = vperm.slane %v387, 0
  %v407 = vunpack.c.l.b16 %v371
  %v408 = vunpack.c.l.b16 %v372
  %v409 = vunpack.c.l.b16 %v373
  %v410 = vunpack.c.l.b16 %v374
  %v411 = vunpack.c.l.b16 %v375
  %v412 = vunpack.c.l.b16 %v376
  %v413 = vunpack.c.l.b16 %v377
  %v414 = vunpack.c.l.b16 %v378
  %v415 = vunpack.c.l.b16 %v379
  %v416 = vunpack.c.l.b16 %v380
  %v417 = vunpack.c.l.b16 %v381
  %v418 = vunpack.c.l.b16 %v382
  %v419 = vunpack.c.l.b16 %v383
  %v420 = vunpack.c.l.b16 %v384
  %v421 = vunpack.c.l.b16 %v385
  %v422 = vunpack.c.l.b16 %v386
  %v423 = vpack.c.b16 %v408, %v407
  %v424 = vpack.c.b16 %v410, %v409
  %v425 = vpack.c.b16 %v412, %v411
  %v426 = vpack.c.b16 %v414, %v413
  %v427 = vpack.c.b16 %v416, %v415
  %v428 = vpack.c.b16 %v418, %v417
  %v429 = vpack.c.b16 %v420, %v419
  %v430 = vpack.c.b16 %v422, %v421
  %439 = vmatpush.bf16.msra.mxu0 %v430
  %440 = vmatpush.bf16.msra.mxu0 %v429
  %441 = vmatpush.bf16.msra.mxu0 %v428
  %442 = vmatpush.bf16.msra.mxu0 %v427
  %443 = vmatpush.bf16.msra.mxu0 %v426
  %444 = vmatpush.bf16.msra.mxu0 %v425
  %445 = vmatpush.bf16.msra.mxu0 %v424
  %446 = vmatpush.bf16.msra.mxu0 %v423
  %447 = vmatmul.bf16.gmra.mxu0 %v370
  %v448 = vpop.f32.mrf.mxu0
  %v449 = vadd.f32 %v389, %v448
  %v450 = vpop.f32.mrf.mxu0
  %v451 = vadd.f32 %v389, %v450
  %452 = vdwg.mxu0
  %vm453 = vcmask 48128
  %454 = vst.msk [vmem:[%s9] sm:$0xff] %vm453, %v449
  %455 = vst.msk [vmem:[%s9 + $0x8] sm:$0xff] %vm453, %v451
  // Predicated region
  $region38: #{iknet_forward.1} parent=0 // pred_check
    _
  $region39: #{iknet_forward.1} parent=0 // pred_check_branch
    %457 = sbr.rel (0) target = $region41
  $region40: #{iknet_forward.1} parent=0 // pred_region
    _
  $region41: #{iknet_forward.1} parent=0 // pred_fallthru
    _
  // Predicated region
  $region42: #{iknet_forward.1} parent=0 // pred_check
    _
  $region43: #{iknet_forward.1} parent=0 // pred_check_branch
    %459 = sbr.rel (0) target = $region45
  $region44: #{iknet_forward.1} parent=0 // pred_region
    _
  $region45: #{iknet_forward.1} parent=0 // pred_fallthru
    _

</llo_original>
